<compile_context>
chip_gen: v7x
topology: tpu7x:2x2x1
jax: 0.10.0
libtpu: 0.0.40
codegen_flags: <defaults>
</compile_context>

<pallas_src>
import functools
import math

import jax
import jax.numpy as jnp
from jax.experimental import pallas as pl
from jax.experimental.pallas import tpu as pltpu

_LANES = 128
_SUBLANES = 8


def _dice_sums_kernel(lg_ref, tg_ref, out_ref, acc_ref):
    """Per-sample partial sums over the feature axis.

    lg_ref, tg_ref : (TR, 128) tiles of logits / targets (sample dim squeezed)
    out_ref        : (3, 8, 128) per-sample lane-dense partial sums
                     [0] = sum(sigmoid(logits) * targets)
                     [1] = sum(sigmoid(logits))
                     [2] = sum(targets)
    acc_ref        : (3, 8, 128) f32 VMEM scratch accumulator
    """
    k = pl.program_id(1)

    @pl.when(k == 0)
    def _():
        acc_ref[...] = jnp.zeros_like(acc_ref)

    probs = jax.nn.sigmoid(lg_ref[...].astype(jnp.float32))
    targs = tg_ref[...].astype(jnp.float32)

    tr = lg_ref.shape[0]
    g = tr // _SUBLANES
    # Tile-aligned fold (TR,128) -> (8,128): pure elementwise vreg adds on the
    # VPU; no cross-lane / XLU work in the hot loop.
    inter = (probs * targs).reshape(g, _SUBLANES, _LANES).sum(axis=0)
    psum = probs.reshape(g, _SUBLANES, _LANES).sum(axis=0)
    tsum = targs.reshape(g, _SUBLANES, _LANES).sum(axis=0)

    acc_ref[0] += inter
    acc_ref[1] += psum
    acc_ref[2] += tsum

    @pl.when(k == pl.num_programs(1) - 1)
    def _():
        out_ref[...] = acc_ref[...]


@functools.partial(jax.jit, static_argnames=("tile_rows",))
def soft_dice_loss(logits, targets, tile_rows=2048):
    """SoftDiceLoss.forward: 1 - mean_n( 2*(sum(p*t)+1) / (sum(p)+sum(t)+1) )."""
    num = logits.shape[0]
    d = math.prod(logits.shape[1:])

    # Keep native dtypes; cast to f32 inside the kernel after load.
    lg = logits.reshape(num, d)
    tg = targets.reshape(num, d)

    # Lane/sublane-dense view: (N, R, 128) rows of 128 lanes per sample.
    r = pl.cdiv(d, _LANES)
    tr = min(tile_rows, pl.cdiv(r, _SUBLANES) * _SUBLANES)
    tr = max(_SUBLANES, (tr // _SUBLANES) * _SUBLANES)
    r_pad = pl.cdiv(r, tr) * tr
    d_pad = r_pad * _LANES

    pad = d_pad - d
    if pad:
        # Ragged-D fallback only (no pad traffic for the common aligned case).
        # Zero-pad both inputs; sigmoid(0) == 0.5 adds exactly 0.5*pad to
        # sum(p), which is subtracted in the epilogue below.
        lg = jnp.pad(lg, ((0, 0), (0, pad)))
        tg = jnp.pad(tg, ((0, 0), (0, pad)))
    lg = lg.reshape(num, r_pad, _LANES)
    tg = tg.reshape(num, r_pad, _LANES)

    grid_k = r_pad // tr

    # VMEM budget: double-buffered input blocks + resident output + scratch,
    # with headroom; capped so it is safe on v7x's 64 MiB / v5e defaults.
    block_in_bytes = tr * _LANES * (lg.dtype.itemsize + tg.dtype.itemsize)
    out_block_bytes = 3 * _SUBLANES * _LANES * 4
    needed = 2 * block_in_bytes + 3 * out_block_bytes + (2 << 20)
    vmem_limit = int(min(32 << 20, max(8 << 20, needed)))

    sums = pl.pallas_call(
        _dice_sums_kernel,
        out_shape=jax.ShapeDtypeStruct((num, 3, _SUBLANES, _LANES), jnp.float32),
        grid_spec=pltpu.PrefetchScalarGridSpec(
            num_scalar_prefetch=0,
            grid=(num, grid_k),
            in_specs=[
                pl.BlockSpec((None, tr, _LANES), lambda n, k: (n, k, 0)),
                pl.BlockSpec((None, tr, _LANES), lambda n, k: (n, k, 0)),
            ],
            out_specs=pl.BlockSpec(
                (None, 3, _SUBLANES, _LANES), lambda n, k: (n, 0, 0, 0)
            ),
            scratch_shapes=[pltpu.VMEM((3, _SUBLANES, _LANES), jnp.float32)],
        ),
        compiler_params=pltpu.CompilerParams(
            dimension_semantics=("parallel", "arbitrary"),
            vmem_limit_bytes=vmem_limit,
        ),
    )(lg, tg)

    # Tiny epilogue: lane/sublane reduce of (N,3,8,128) and the scalar combine.
    sums = jnp.sum(sums, axis=(-2, -1))  # (N, 3)
    smooth = 1.0
    intersection = sums[:, 0]
    m1_sum = sums[:, 1]
    m2_sum = sums[:, 2]
    if pad:
        m1_sum = m1_sum - 0.5 * pad  # exact correction for zero-padded logits
    score = 2.0 * (intersection + smooth) / (m1_sum + m2_sum + smooth)
    return 1.0 - jnp.sum(score) / num


def _reference(logits, targets):
    num = logits.shape[0]
    probs = jax.nn.sigmoid(logits.astype(jnp.float32))
    m1 = probs.reshape(num, -1)
    m2 = targets.astype(jnp.float32).reshape(num, -1)
    inter = (m1 * m2).sum(1)
    score = 2.0 * (inter + 1.0) / (m1.sum(1) + m2.sum(1) + 1.0)
    return 1.0 - score.sum() / num


if __name__ == "__main__":
    key = jax.random.PRNGKey(0)
    k1, k2 = jax.random.split(key)

    # SoftDiceLoss has no parameters; inputs follow a typical segmentation
    # shape (N, C, H, W) = (2, 4, 16, 16).
    logits = jax.random.normal(k1, (2, 4, 16, 16), dtype=jnp.float32)
    targets = (jax.random.uniform(k2, (2, 4, 16, 16)) > 0.5).astype(jnp.float32)

    loss = soft_dice_loss(logits, targets)
    loss = jax.block_until_ready(loss)

    ref = _reference(logits, targets)
    assert jnp.allclose(loss, ref, atol=1e-5, rtol=1e-5), (loss, ref)

    print("KERNEL_OK")
</pallas_src>

<mosaic_0001>
module attributes {stable_mosaic.version = 11 : i64} {
  func.func @_dice_sums_kernel(%arg0: i32, %arg1: i32, %arg2: memref<1x8x128xf32, #tpu.memory_space<vmem>>, %arg3: memref<1x8x128xf32, #tpu.memory_space<vmem>>, %arg4: memref<1x3x8x128xf32, #tpu.memory_space<vmem>>, %arg5: memref<3x8x128xf32, #tpu.memory_space<vmem>>) attributes {dimension_semantics = [#tpu.dimension_semantics<parallel>, #tpu.dimension_semantics<arbitrary>], iteration_bounds = array<i64: 2, 1>, scalar_prefetch = 0 : i64, scratch_operands = 1 : i64, tpu.core_type = #tpu.core_type<tc>, window_params = [{transform_indices = @transform_0, window_bounds = array<i64: 1, 8, 128>}, {transform_indices = @transform_1, window_bounds = array<i64: 1, 8, 128>}, {transform_indices = @transform_2, window_bounds = array<i64: 1, 3, 8, 128>}]} {
    %c0_i32 = arith.constant 0 : i32
    %0 = arith.cmpi eq, %arg1, %c0_i32 : i32
    %1 = arith.extui %0 : i1 to i32
    %c0_i32_0 = arith.constant 0 : i32
    %2 = arith.cmpi ne, %1, %c0_i32_0 : i32
    scf.if %2 {
      %cst_27 = arith.constant 0.000000e+00 : f32
      %40 = vector.broadcast %cst_27 : f32 to vector<3x8x128xf32>
      %c0_28 = arith.constant 0 : index
      %c0_29 = arith.constant 0 : index
      %c0_30 = arith.constant 0 : index
      %41 = vector.load %arg5[%c0_28, %c0_29, %c0_30] : memref<3x8x128xf32, #tpu.memory_space<vmem>>, vector<3x8x128xf32>
      tpu.vector_store %arg5[%c0_28, %c0_29, %c0_30], %40 {strides = array<i32>} : memref<3x8x128xf32, #tpu.memory_space<vmem>>, vector<3x8x128xf32>,
    } else {
    }
    %c0 = arith.constant 0 : index
    %c0_1 = arith.constant 0 : index
    %c0_2 = arith.constant 0 : index
    %3 = vector.load %arg2[%c0, %c0_1, %c0_2] : memref<1x8x128xf32, #tpu.memory_space<vmem>>, vector<1x8x128xf32>
    %4 = vector.shape_cast %3 : vector<1x8x128xf32> to vector<8x128xf32>
    %5 = arith.negf %4 : vector<8x128xf32>
    %6 = math.exp %5 : vector<8x128xf32>
    %cst = arith.constant 1.000000e+00 : f32
    %7 = vector.broadcast %cst : f32 to vector<8x128xf32>
    %8 = arith.addf %7, %6 : vector<8x128xf32>
    %9 = arith.divf %7, %8 : vector<8x128xf32>
    %c0_3 = arith.constant 0 : index
    %c0_4 = arith.constant 0 : index
    %c0_5 = arith.constant 0 : index
    %10 = vector.load %arg3[%c0_3, %c0_4, %c0_5] : memref<1x8x128xf32, #tpu.memory_space<vmem>>, vector<1x8x128xf32>
    %11 = vector.shape_cast %10 : vector<1x8x128xf32> to vector<8x128xf32>
    %12 = arith.mulf %9, %11 : vector<8x128xf32>
    %13 = vector.shape_cast %12 : vector<8x128xf32> to vector<1x8x128xf32>
    %cst_6 = arith.constant dense<0.000000e+00> : vector<8x128xf32>
    %14 = vector.multi_reduction <add>, %13, %cst_6 [0] : vector<1x8x128xf32> to vector<8x128xf32>
    %15 = vector.shape_cast %9 : vector<8x128xf32> to vector<1x8x128xf32>
    %cst_7 = arith.constant dense<0.000000e+00> : vector<8x128xf32>
    %16 = vector.multi_reduction <add>, %15, %cst_7 [0] : vector<1x8x128xf32> to vector<8x128xf32>
    %17 = vector.shape_cast %11 : vector<8x128xf32> to vector<1x8x128xf32>
    %cst_8 = arith.constant dense<0.000000e+00> : vector<8x128xf32>
    %18 = vector.multi_reduction <add>, %17, %cst_8 [0] : vector<1x8x128xf32> to vector<8x128xf32>
    %c0_9 = arith.constant 0 : index
    %c0_10 = arith.constant 0 : index
    %c0_11 = arith.constant 0 : index
    %19 = vector.load %arg5[%c0_9, %c0_10, %c0_11] : memref<3x8x128xf32, #tpu.memory_space<vmem>>, vector<1x8x128xf32>
    %20 = vector.shape_cast %19 : vector<1x8x128xf32> to vector<8x128xf32>
    %21 = arith.addf %20, %14 : vector<8x128xf32>
    %c0_12 = arith.constant 0 : index
    %c0_13 = arith.constant 0 : index
    %c0_14 = arith.constant 0 : index
    %22 = vector.load %arg5[%c0_12, %c0_13, %c0_14] : memref<3x8x128xf32, #tpu.memory_space<vmem>>, vector<1x8x128xf32>
    %23 = vector.shape_cast %22 : vector<1x8x128xf32> to vector<8x128xf32>
    %24 = vector.shape_cast %21 : vector<8x128xf32> to vector<1x8x128xf32>
    tpu.vector_store %arg5[%c0_12, %c0_13, %c0_14], %24 {strides = array<i32>} : memref<3x8x128xf32, #tpu.memory_space<vmem>>, vector<1x8x128xf32>,
    %c1 = arith.constant 1 : index
    %c0_15 = arith.constant 0 : index
    %c0_16 = arith.constant 0 : index
    %25 = vector.load %arg5[%c1, %c0_15, %c0_16] : memref<3x8x128xf32, #tpu.memory_space<vmem>>, vector<1x8x128xf32>
    %26 = vector.shape_cast %25 : vector<1x8x128xf32> to vector<8x128xf32>
    %27 = arith.addf %26, %16 : vector<8x128xf32>
    %c1_17 = arith.constant 1 : index
    %c0_18 = arith.constant 0 : index
    %c0_19 = arith.constant 0 : index
    %28 = vector.load %arg5[%c1_17, %c0_18, %c0_19] : memref<3x8x128xf32, #tpu.memory_space<vmem>>, vector<1x8x128xf32>
    %29 = vector.shape_cast %28 : vector<1x8x128xf32> to vector<8x128xf32>
    %30 = vector.shape_cast %27 : vector<8x128xf32> to vector<1x8x128xf32>
    tpu.vector_store %arg5[%c1_17, %c0_18, %c0_19], %30 {strides = array<i32>} : memref<3x8x128xf32, #tpu.memory_space<vmem>>, vector<1x8x128xf32>,
    %c2 = arith.constant 2 : index
    %c0_20 = arith.constant 0 : index
    %c0_21 = arith.constant 0 : index
    %31 = vector.load %arg5[%c2, %c0_20, %c0_21] : memref<3x8x128xf32, #tpu.memory_space<vmem>>, vector<1x8x128xf32>
    %32 = vector.shape_cast %31 : vector<1x8x128xf32> to vector<8x128xf32>
    %33 = arith.addf %32, %18 : vector<8x128xf32>
    %c2_22 = arith.constant 2 : index
    %c0_23 = arith.constant 0 : index
    %c0_24 = arith.constant 0 : index
    %34 = vector.load %arg5[%c2_22, %c0_23, %c0_24] : memref<3x8x128xf32, #tpu.memory_space<vmem>>, vector<1x8x128xf32>
    %35 = vector.shape_cast %34 : vector<1x8x128xf32> to vector<8x128xf32>
    %36 = vector.shape_cast %33 : vector<8x128xf32> to vector<1x8x128xf32>
    tpu.vector_store %arg5[%c2_22, %c0_23, %c0_24], %36 {strides = array<i32>} : memref<3x8x128xf32, #tpu.memory_space<vmem>>, vector<1x8x128xf32>,
    %c0_i32_25 = arith.constant 0 : i32
    %37 = arith.cmpi eq, %arg1, %c0_i32_25 : i32
    %38 = arith.extui %37 : i1 to i32
    %c0_i32_26 = arith.constant 0 : i32
    %39 = arith.cmpi ne, %38, %c0_i32_26 : i32
    scf.if %39 {
      %c0_27 = arith.constant 0 : index
      %c0_28 = arith.constant 0 : index
      %c0_29 = arith.constant 0 : index
      %40 = vector.load %arg5[%c0_27, %c0_28, %c0_29] : memref<3x8x128xf32, #tpu.memory_space<vmem>>, vector<3x8x128xf32>
      %c0_30 = arith.constant 0 : index
      %c0_31 = arith.constant 0 : index
      %c0_32 = arith.constant 0 : index
      %c0_33 = arith.constant 0 : index
      %41 = vector.load %arg4[%c0_30, %c0_31, %c0_32, %c0_33] : memref<1x3x8x128xf32, #tpu.memory_space<vmem>>, vector<1x3x8x128xf32>
      %42 = vector.shape_cast %41 : vector<1x3x8x128xf32> to vector<3x8x128xf32>
      %43 = vector.shape_cast %40 : vector<3x8x128xf32> to vector<1x3x8x128xf32>
      tpu.vector_store %arg4[%c0_30, %c0_31, %c0_32, %c0_33], %43 {strides = array<i32>} : memref<1x3x8x128xf32, #tpu.memory_space<vmem>>, vector<1x3x8x128xf32>,
    } else {
    }
    return
  }
  func.func @transform_0(%arg0: i32, %arg1: i32) -> (i32, i32, i32) {
    %c0_i32 = arith.constant 0 : i32
    %c0_i32_0 = arith.constant 0 : i32
    return %arg0, %arg1, %c0_i32 : i32, i32, i32
  }
  func.func @transform_1(%arg0: i32, %arg1: i32) -> (i32, i32, i32) {
    %c0_i32 = arith.constant 0 : i32
    %c0_i32_0 = arith.constant 0 : i32
    return %arg0, %arg1, %c0_i32 : i32, i32, i32
  }
  func.func @transform_2(%arg0: i32, %arg1: i32) -> (i32, i32, i32, i32) {
    %c0_i32 = arith.constant 0 : i32
    %c0_i32_0 = arith.constant 0 : i32
    %c0_i32_1 = arith.constant 0 : i32
    %c0_i32_2 = arith.constant 0 : i32
    return %arg0, %c0_i32, %c0_i32_0, %c0_i32_1 : i32, i32, i32, i32
  }
}

</mosaic_0001>

<llo_original>
// kernel: soft_dice_loss.1
$region0: #{soft_dice_loss.1}
  #allocation0 [shape = 'u32[]', space=smem, size = 0x4, offset = 0x4, fixed_abs, tag = 'smem constant byte address 0x4 - core index']
  #allocation1 [shape = 'u32[144,128]{1,0:T(1,128)}', space=vmem, size = 0x12000, scoped, tag = 'internal scratch']
  #allocation2 [shape = 'f32[3,8,128]{2,1,0:T(8,128)}', space=vmem, size = 0x3000, scoped, tag = 'scratch operand']
  %s0 = inlined_call_operand.vmem [shape: f32[2,8,128], index: 0, kind: input, shape index: {}]
  %s1 = inlined_call_operand.vmem [shape: f32[2,8,128], index: 1, kind: input, shape index: {}]
  %s2 = inlined_call_operand.vmem [shape: f32[2,3,8,128], index: 2, kind: output, shape index: {}]
  %s3 = sld [smem:[#allocation0]]
  $region49: #{soft_dice_loss.1} parent=0
    _
  %s5 = ssub.s32 1, %s3
  %s6 = scalar_select 0, %s5, %s3
  loop: start=0, step=1, limit=4
  $region2: #{soft_dice_loss.1} parent=0 // loop_pre_header
    _
  $region3: #{soft_dice_loss.1} parent=0 // loop_header
    %s8 = sphi 0, %s12
    %p9 = scmp.ge.s32.totalorder %s8, 4
    %s15 = sphi 0, %s27
    %s16 = sphi 0, %s23
    %s17 = sphi 0, %s15
    %s18 = sphi 0, %s16
    %s19 = sphi 0, %s17
    %s20 = sphi 0, %s18
    %s32 = sphi 0, %s34
    %s35 = sphi 0, %s32
    %s36 = sphi 0, %s35
    %s52 = sphi 0, %s36
    %s60 = sphi 0, %s62
    %s63 = sphi 0, %s60
    %s64 = sphi 0, %s63
    %s80 = sphi 0, %s64
    %s86 = sphi 0, %s88
    %s89 = sphi 0, %s86
    %s90 = sphi 0, %s89
    %s106 = sphi 0, %s90
  $region4: #{soft_dice_loss.1} parent=0 // loop_header_branch
    %11 = sbr.rel (%p9) target = $region8
  $region5: #{soft_dice_loss.1} parent=0 // loop_body
    %s13 = ssub.s32 %s8, 1
    %s14 = ssub.s32 %s8, 2
    %s21 = sadd.s32 1, %s16
    %p22 = scmp.ge.s32.totalorder %s21, 1
    %s23 = scalar_select %p22, 0, %s21
    %s24 = sadd.s32 1, %s15
    %s25 = scalar_select %p22, %s24, %s15
    %p26 = scmp.ge.s32.totalorder %s25, 2
    %s27 = scalar_select %p26, 0, %s25
    %s28 = ssub.s32 %s15, %s27
    %s29 = ssub.s32 %s16, %s23
    %s30 = sor.u32 %s28, %s29
    %p31 = scmp.eq.s32.totalorder %s30, 0
    %s33 = sadd.s32 %s32, 1
    %s34 = scalar_select %p31, %s32, %s33
    %p37 = pneg %p31
    %p38 = scmp.eq.s32.totalorder %s8, 1
    %p39 = por %p37, %p38
    %p40 = scmp.ne.s32.totalorder %s32, %s35
    %p41 = scmp.eq.s32.totalorder %s8, 0
    %p42 = por %p40, %p41
    %p43 = scmp.ne.s32.totalorder %s32, %s35
    %p44 = scmp.eq.s32.totalorder %s13, 1
    %p45 = por %p43, %p44
    %p46 = scmp.ne.s32.totalorder %s35, %s36
    %p47 = scmp.eq.s32.totalorder %s13, 0
    %p48 = por %p46, %p47
    %p49 = scmp.ne.s32.totalorder %s35, %s36
    %p50 = scmp.eq.s32.totalorder %s14, 1
    %p51 = por %p49, %p50
    %p53 = scmp.ne.s32.totalorder %s36, %s52
    %p54 = scmp.eq.s32.totalorder %s14, 0
    %p55 = por %p53, %p54
    %s56 = ssub.s32 %s15, %s27
    %s57 = ssub.s32 %s16, %s23
    %s58 = sor.u32 %s56, %s57
    %p59 = scmp.eq.s32.totalorder %s58, 0
    %s61 = sadd.s32 %s60, 1
    %s62 = scalar_select %p59, %s60, %s61
    %p65 = pneg %p59
    %p66 = scmp.eq.s32.totalorder %s8, 1
    %p67 = por %p65, %p66
    %p68 = scmp.ne.s32.totalorder %s60, %s63
    %p69 = scmp.eq.s32.totalorder %s8, 0
    %p70 = por %p68, %p69
    %p71 = scmp.ne.s32.totalorder %s60, %s63
    %p72 = scmp.eq.s32.totalorder %s13, 1
    %p73 = por %p71, %p72
    %p74 = scmp.ne.s32.totalorder %s63, %s64
    %p75 = scmp.eq.s32.totalorder %s13, 0
    %p76 = por %p74, %p75
    %p77 = scmp.ne.s32.totalorder %s63, %s64
    %p78 = scmp.eq.s32.totalorder %s14, 1
    %p79 = por %p77, %p78
    %p81 = scmp.ne.s32.totalorder %s64, %s80
    %p82 = scmp.eq.s32.totalorder %s14, 0
    %p83 = por %p81, %p82
    %s84 = ssub.s32 %s15, %s27
    %p85 = scmp.eq.s32.totalorder %s84, 0
    %s87 = sadd.s32 %s86, 1
    %s88 = scalar_select %p85, %s86, %s87
    %p91 = pneg %p85
    %p92 = scmp.eq.s32.totalorder %s8, 1
    %p93 = por %p91, %p92
    %p94 = scmp.ne.s32.totalorder %s86, %s89
    %p95 = scmp.eq.s32.totalorder %s8, 0
    %p96 = por %p94, %p95
    %p97 = scmp.ne.s32.totalorder %s86, %s89
    %p98 = scmp.eq.s32.totalorder %s13, 1
    %p99 = por %p97, %p98
    %p100 = scmp.ne.s32.totalorder %s89, %s90
    %p101 = scmp.eq.s32.totalorder %s13, 0
    %p102 = por %p100, %p101
    %p103 = scmp.ne.s32.totalorder %s89, %s90
    %p104 = scmp.eq.s32.totalorder %s14, 1
    %p105 = por %p103, %p104
    %p107 = scmp.ne.s32.totalorder %s90, %s106
    %p108 = scmp.eq.s32.totalorder %s14, 0
    %p109 = por %p107, %p108
    %p110 = scmp.le.s32.totalorder 1, %s8
    %p111 = scmp.lt.s32.totalorder %s8, 3
    %p112 = pnand %p110, %p111
    %p113 = pneg %p112
    // Predicated region
    $region9: #{soft_dice_loss.1} parent=5 // pred_check
      _
    $region10: #{soft_dice_loss.1} parent=5 // pred_check_branch
      %115 = sbr.rel (%p112) target = $region12
    $region11: #{soft_dice_loss.1} parent=5 // pred_region
      %s116 = ssub.s32 %s8, 1
    $region12: #{soft_dice_loss.1} parent=5 // pred_fallthru
      _
    %p117 = scmp.lt.s32.totalorder %s8, 2
    // Predicated region
    $region13: #{soft_dice_loss.1} parent=5 // pred_check
      %p118 = pneg %p117
    $region14: #{soft_dice_loss.1} parent=5 // pred_check_branch
      %120 = sbr.rel (%p118) target = $region16
    $region15: #{soft_dice_loss.1} parent=5 // pred_region
      // Predicated region
      $region17: #{soft_dice_loss.1} parent=15 // pred_check
        %p121 = pneg %p42
      $region18: #{soft_dice_loss.1} parent=15 // pred_check_branch
        %123 = sbr.rel (%p121) target = $region20
      $region19: #{soft_dice_loss.1} parent=15 // pred_region
        %p124 = scmp.lt.s32.totalorder %s15, 1
        %s125 = scalar_select %p124, %s15, 1
        %p126 = scmp.lt.s32.totalorder %s16, 0
        %s127 = scalar_select %p126, %s16, 0
        %s128 = sadd.s32 %s127, %s125
        %s129 = smul.addr %s128, 8
        %s130 = scalar_lea.vmem %s0, %s129
      $region20: #{soft_dice_loss.1} parent=15 // pred_fallthru
        _
      // Predicated region
      $region21: #{soft_dice_loss.1} parent=15 // pred_check
        %p131 = pneg %p70
      $region22: #{soft_dice_loss.1} parent=15 // pred_check_branch
        %133 = sbr.rel (%p131) target = $region24
      $region23: #{soft_dice_loss.1} parent=15 // pred_region
        %p134 = scmp.lt.s32.totalorder %s15, 1
        %s135 = scalar_select %p134, %s15, 1
        %p136 = scmp.lt.s32.totalorder %s16, 0
        %s137 = scalar_select %p136, %s16, 0
        %s138 = sadd.s32 %s137, %s135
        %s139 = smul.addr %s138, 8
        %s140 = scalar_lea.vmem %s1, %s139
      $region24: #{soft_dice_loss.1} parent=15 // pred_fallthru
        _
    $region16: #{soft_dice_loss.1} parent=5 // pred_fallthru
      _
    %p141 = scmp.le.s32.totalorder 1, %s8
    %p142 = scmp.lt.s32.totalorder %s8, 3
    %p143 = pnand %p141, %p142
    %p144 = pneg %p143
    // Predicated region
    $region25: #{soft_dice_loss.1} parent=5 // pred_check
      _
    $region26: #{soft_dice_loss.1} parent=5 // pred_check_branch
      %146 = sbr.rel (%p143) target = $region28
    $region27: #{soft_dice_loss.1} parent=5 // pred_region
      %s147 = ssub.s32 %s8, 1
      %p148 = scmp.lt.s32.totalorder %s17, 1
      %s149 = scalar_select %p148, %s17, 1
      %p150 = scmp.lt.s32.totalorder %s18, 0
      %s151 = scalar_select %p150, %s18, 0
      %s152 = sadd.s32 %s151, %s149
      %s153 = smul.addr %s152, 8
      %s154 = scalar_lea.vmem %s0, %s153
      %p155 = pneg %p48
      %p156 = pneg %p45
      %p157 = scmp.lt.s32.totalorder %s17, 1
      %s158 = scalar_select %p157, %s17, 1
      %p159 = scmp.lt.s32.totalorder %s18, 0
      %s160 = scalar_select %p159, %s18, 0
      %s161 = sadd.s32 %s160, %s158
      %s162 = smul.addr %s161, 8
      %s163 = scalar_lea.vmem %s1, %s162
      %p164 = pneg %p76
      %p165 = pneg %p73
      %p166 = pneg %p102
      %p167 = pneg %p99
      %p168 = scmp.lt.s32.totalorder %s17, 1
      %s169 = scalar_select %p168, %s17, 1
      %s170 = smul.addr %s169, 3
      %s171 = smul.addr %s170, 8
      %s172 = scalar_lea.vmem %s2, %s171
      %p173 = scmp.lt.s32.totalorder %s17, 1
      %s174 = scalar_select %p173, %s17, 1
      %p175 = scmp.lt.s32.totalorder %s18, 0
      %s176 = scalar_select %p175, %s18, 0
      %s177 = sadd.s32 %s176, %s174
      %s178 = smul.addr %s177, 8
      %s179 = scalar_lea.vmem %s0, %s178
      %p180 = scmp.lt.s32.totalorder %s17, 1
      %s181 = scalar_select %p180, %s17, 1
      %p182 = scmp.lt.s32.totalorder %s18, 0
      %s183 = scalar_select %p182, %s18, 0
      %s184 = sadd.s32 %s183, %s181
      %s185 = smul.addr %s184, 8
      %s186 = scalar_lea.vmem %s1, %s185
      %p187 = scmp.lt.s32.totalorder %s17, 1
      %s188 = scalar_select %p187, %s17, 1
      %s189 = smul.addr %s188, 3
      %s190 = smul.addr %s189, 8
      %s191 = scalar_lea.vmem %s2, %s190
      %p192 = scmp.eq.s32.totalorder %s18, 0
      // Predicated region
      $region29: #{soft_dice_loss.1} parent=27 // pred_check
        %p193 = pneg %p192
      $region30: #{soft_dice_loss.1} parent=27 // pred_check_branch
        %195 = sbr.rel (%p193) target = $region32
      $region31: #{soft_dice_loss.1} parent=27 // pred_region
        %196 = vst [vmem:[#allocation2] sm:$0xff] 0.0
        %197 = vst [vmem:[#allocation2 + $0x8] sm:$0xff] 0.0
        %198 = vst [vmem:[#allocation2 + $0x10] sm:$0xff] 0.0
      $region32: #{soft_dice_loss.1} parent=27 // pred_fallthru
        _
      %v199 = vld [vmem:[%s179] sm:$0xff]
      %v200 = vxor.u32 %v199, 2147483648
      %v201 = vmul.f32 %v200, 1.442695
      %v202 = vpow.pop %v201
      %v203 = vadd.f32 %v202, 1.0
      %v204 = vrcp.pop %v203
      %v205 = vmul.f32 1.0, %v204
      %v206 = vld [vmem:[%s186] sm:$0xff]
      %v207 = vmul.f32 %v205, %v206
      %v208 = vadd.f32 %v207, 0.0
      %v209 = vadd.f32 %v205, 0.0
      %v210 = vadd.f32 %v206, 0.0
      %v211 = vld [vmem:[#allocation2] sm:$0xff]
      %v212 = vadd.f32 %v211, %v208
      %213 = vst [vmem:[#allocation2] sm:$0xff] %v212
      %s214 = scalar_lea.vmem [#allocation2], 8
      %v215 = vld [vmem:[%s214] sm:$0xff]
      %v216 = vadd.f32 %v215, %v209
      %217 = vst [vmem:[%s214] sm:$0xff] %v216
      %s218 = scalar_lea.vmem [#allocation2], 16
      %v219 = vld [vmem:[%s218] sm:$0xff]
      %v220 = vadd.f32 %v219, %v210
      %221 = vst [vmem:[%s218] sm:$0xff] %v220
      // Predicated region
      $region33: #{soft_dice_loss.1} parent=27 // pred_check
        %p222 = pneg %p192
      $region34: #{soft_dice_loss.1} parent=27 // pred_check_branch
        %224 = sbr.rel (%p222) target = $region36
      $region35: #{soft_dice_loss.1} parent=27 // pred_region
        %v225 = vld [vmem:[#allocation2] sm:$0xff]
        %v226 = vld [vmem:[#allocation2 + $0x8] sm:$0xff]
        %v227 = vld [vmem:[#allocation2 + $0x10] sm:$0xff]
        %228 = vst [vmem:[%s191] sm:$0xff] %v225
        %229 = vst [vmem:[%s191 + $0x8] sm:$0xff] %v226
        %230 = vst [vmem:[%s191 + $0x10] sm:$0xff] %v227
      $region36: #{soft_dice_loss.1} parent=27 // pred_fallthru
        _
      %p231 = scmp.lt.s32.totalorder %s17, 1
      %s232 = scalar_select %p231, %s17, 1
      %s233 = smul.addr %s232, 3
      %s234 = smul.addr %s233, 8
      %s235 = scalar_lea.vmem %s2, %s234
      // Predicated region
      $region37: #{soft_dice_loss.1} parent=27 // pred_check
        %p236 = pneg %p99
      $region38: #{soft_dice_loss.1} parent=27 // pred_check_branch
        %238 = sbr.rel (%p236) target = $region40
      $region39: #{soft_dice_loss.1} parent=27 // pred_region
        _
      $region40: #{soft_dice_loss.1} parent=27 // pred_fallthru
        _
    $region28: #{soft_dice_loss.1} parent=5 // pred_fallthru
      _
    %p239 = scmp.le.s32.totalorder 2, %s8
    // Predicated region
    $region41: #{soft_dice_loss.1} parent=5 // pred_check
      %p240 = pneg %p239
    $region42: #{soft_dice_loss.1} parent=5 // pred_check_branch
      %242 = sbr.rel (%p240) target = $region44
    $region43: #{soft_dice_loss.1} parent=5 // pred_region
      %s243 = ssub.s32 %s8, 2
      // Predicated region
      $region45: #{soft_dice_loss.1} parent=43 // pred_check
        %p244 = pneg %p105
      $region46: #{soft_dice_loss.1} parent=43 // pred_check_branch
        %246 = sbr.rel (%p244) target = $region48
      $region47: #{soft_dice_loss.1} parent=43 // pred_region
        %p247 = scmp.lt.s32.totalorder %s19, 1
        %s248 = scalar_select %p247, %s19, 1
        %s249 = smul.addr %s248, 3
        %s250 = smul.addr %s249, 8
        %s251 = scalar_lea.vmem %s2, %s250
      $region48: #{soft_dice_loss.1} parent=43 // pred_fallthru
        _
    $region44: #{soft_dice_loss.1} parent=5 // pred_fallthru
      _
  $region6: #{soft_dice_loss.1} parent=0 // loop_footer
    %s12 = sadd.s32 1, %s8
  $region7: #{soft_dice_loss.1} parent=0 // loop_footer_branch
    %7 = sbr.rel target = $region3
  $region8: #{soft_dice_loss.1} parent=0 // loop_exit
    _

</llo_original>
